<compile_context>
chip_gen: v5e
topology: v5e:2x2
jax: 0.10.0
libtpu: 0.0.40
codegen_flags: <defaults>
</compile_context>

<pallas_src>
import functools

import jax
import jax.numpy as jnp
from jax import lax
from jax.experimental import pallas as pl
from jax.experimental.pallas import tpu as pltpu


def _focal_loss_kernel(n_ref, scale_ref, slab_ref, alpha_ref, out_ref, acc_ref,
                       *, gamma):
    p_idx = pl.program_id(0)          # partial (TensorCore) index
    i = pl.program_id(1)              # batch-block index within this partial
    nb = pl.num_programs(1)

    @pl.when(i == 0)
    def _init():
        acc_ref[...] = jnp.zeros_like(acc_ref)

    slab = slab_ref[...]                                   # (C+1, TN) f32
    c = slab.shape[0] - 1
    tn = slab.shape[1]
    x = slab[:c, :]                                        # (C, TN) logits
    t = slab[c:c + 1, :].astype(jnp.int32)                 # (1, TN) targets
    a = alpha_ref[...]                                     # (C, 1)

    # One-hot class mask along the sublane (class) axis.
    row = lax.broadcasted_iota(jnp.int32, (c, tn), 0)
    class_mask = (row == t).astype(jnp.float32)            # (C, TN)

    # Log-softmax for the target class; exp(x - m) reused for probs.
    m = jnp.max(x, axis=0, keepdims=True)                  # (1, TN)
    e = jnp.exp(x - m)                                     # (C, TN)  (EUP)
    s = jnp.sum(e, axis=0, keepdims=True)                  # (1, TN)
    x_t = jnp.sum(x * class_mask, axis=0, keepdims=True)   # (1, TN)
    e_t = jnp.sum(e * class_mask, axis=0, keepdims=True)   # (1, TN)

    log_p = (x_t - m) - jnp.log(s)                         # (1, TN)
    probs = e_t / s                                        # (1, TN)
    one_minus_p = 1.0 - probs

    g = float(gamma)
    if g == int(g) and 0 <= int(g) <= 4:                   # gamma=2 fast path
        focal = jnp.ones_like(one_minus_p)
        for _ in range(int(g)):
            focal = focal * one_minus_p
    else:
        focal = jnp.power(one_minus_p, g)

    # alpha[target[n]] via the same class mask (alpha is a tiny resident op).
    alpha_t = jnp.sum(a * class_mask, axis=0, keepdims=True)   # (1, TN)

    loss = -(alpha_t * focal) * log_p                      # (1, TN)

    # Mask garbage lanes of partial / phantom blocks.  The select blocks any
    # NaN/Inf produced from uninitialized padding before it can reach acc.
    lane = lax.broadcasted_iota(jnp.int32, (1, tn), 1)
    global_idx = (p_idx * nb + i) * tn + lane
    loss = jnp.where(global_idx < n_ref[0], loss, 0.0)

    acc_ref[...] = acc_ref[...] + loss

    @pl.when(i == nb - 1)
    def _finalize():
        out_ref[0, 0] = jnp.sum(acc_ref[...]) * scale_ref[0]


def focal_loss(logits, targets, alpha, *, gamma=2.0, size_average=True,
               tile_n=32768, num_partials=2):
    """logits: (N, C) f32, targets: (N,) int, alpha: (C,) f32. Returns scalar."""
    n, c = logits.shape

    # Single fused wrapper pass: (C+1, N) slab = [logits.T ; targets-as-f32].
    slab = jnp.concatenate(
        [logits.astype(jnp.float32).T,
         targets.astype(jnp.float32).reshape(1, n)], axis=0)      # (C+1, N)
    a = alpha.astype(jnp.float32).reshape(c, 1)                   # (C, 1)

    # Batch tile (lanes): multiple of 128, no larger than needed.
    tn = min(int(tile_n), pl.cdiv(n, 128) * 128)
    tn = max(128, pl.cdiv(tn, 128) * 128)
    nblocks = pl.cdiv(n, tn)                 # real batch blocks
    npart = max(1, min(int(num_partials), nblocks))
    nb = pl.cdiv(nblocks, npart)             # blocks per partial (grid axis 1)

    n_smem = jnp.asarray([n], dtype=jnp.int32)
    scale = jnp.asarray([1.0 / n if size_average else 1.0], dtype=jnp.float32)

    def slab_map(pi, bi):
        # Clamp phantom trailing blocks onto the last real block; their
        # contribution is zeroed in-kernel by the global-index mask.
        return (0, jnp.minimum(pi * nb + bi, nblocks - 1))

    kernel = functools.partial(_focal_loss_kernel, gamma=float(gamma))

    partials = pl.pallas_call(
        kernel,
        out_shape=jax.ShapeDtypeStruct((npart, 1), jnp.float32),
        grid=(npart, nb),
        in_specs=[
            pl.BlockSpec(memory_space=pltpu.MemorySpace.SMEM),    # n_valid (1,)
            pl.BlockSpec(memory_space=pltpu.MemorySpace.SMEM),    # scale   (1,)
            pl.BlockSpec((c + 1, tn), slab_map),                  # slab (C+1,TN)
            pl.BlockSpec((c, 1), lambda pi, bi: (0, 0)),          # alpha, resident
        ],
        out_specs=pl.BlockSpec((1, 1), lambda pi, bi: (pi, 0),
                               memory_space=pltpu.MemorySpace.SMEM),
        scratch_shapes=[pltpu.VMEM((1, tn), jnp.float32)],        # vector acc
        compiler_params=pltpu.CompilerParams(
            dimension_semantics=("parallel", "arbitrary"),
            vmem_limit_bytes=40 * 1024 * 1024),
    )(n_smem, scale, slab, a)

    return jnp.sum(partials)


def _ref_focal(logits, targets, alpha, gamma, size_average):
    p = jax.nn.softmax(logits, axis=1)
    pt = p[jnp.arange(logits.shape[0]), targets]
    at = alpha[targets]
    bl = -at * (1.0 - pt) ** gamma * jnp.log(pt)
    return jnp.mean(bl) if size_average else jnp.sum(bl)


if __name__ == "__main__":
    class_num = 4
    key = jax.random.PRNGKey(0)
    k1, k2, k3, k4 = jax.random.split(key, 4)

    # Test 1: module defaults (alpha=0.25 per class, gamma=2, size_average).
    batch = 8
    alpha1 = jnp.full((class_num,), 0.25, dtype=jnp.float32)
    logits1 = jax.random.normal(k1, (batch, class_num), dtype=jnp.float32)
    targets1 = jax.random.randint(k2, (batch,), 0, class_num, dtype=jnp.int32)

    loss1 = focal_loss(logits1, targets1, alpha1, gamma=2.0, size_average=True)
    jax.block_until_ready(loss1)
    ref1 = _ref_focal(logits1, targets1, alpha1, 2.0, True)
    assert jnp.allclose(loss1, ref1, rtol=1e-5, atol=1e-6), (loss1, ref1)

    # Test 2: multi-block / multi-partial / edge-mask path (small tile to
    # force it), non-uniform alpha, gamma=3, size_average=False.
    batch2 = 300
    alpha2 = jnp.array([0.25, 0.5, 0.75, 1.0], dtype=jnp.float32)
    logits2 = 4.0 * jax.random.normal(k3, (batch2, class_num), dtype=jnp.float32)
    targets2 = jax.random.randint(k4, (batch2,), 0, class_num, dtype=jnp.int32)

    loss2 = focal_loss(logits2, targets2, alpha2, gamma=3.0,
                       size_average=False, tile_n=128, num_partials=2)
    jax.block_until_ready(loss2)
    ref2 = _ref_focal(logits2, targets2, alpha2, 3.0, False)
    assert jnp.allclose(loss2, ref2, rtol=1e-4, atol=1e-5), (loss2, ref2)

    print("KERNEL_OK")
</pallas_src>

<mosaic_0001>
module attributes {stable_mosaic.version = 11 : i64} {
  func.func @_focal_loss_kernel(%arg0: i32, %arg1: i32, %arg2: memref<1xi32, #tpu.memory_space<smem>>, %arg3: memref<1xf32, #tpu.memory_space<smem>>, %arg4: memref<5x128xf32, #tpu.memory_space<vmem>>, %arg5: memref<4x1xf32, #tpu.memory_space<vmem>>, %arg6: memref<1x1xf32, #tpu.memory_space<smem>>, %arg7: memref<1x128xf32, #tpu.memory_space<vmem>>) attributes {dimension_semantics = [#tpu.dimension_semantics<parallel>, #tpu.dimension_semantics<arbitrary>], iteration_bounds = array<i64: 1, 1>, scalar_prefetch = 0 : i64, scratch_operands = 1 : i64, tpu.core_type = #tpu.core_type<tc>, window_params = [{transform_indices = @transform_0, window_bounds = array<i64: 1>}, {transform_indices = @transform_1, window_bounds = array<i64: 1>}, {transform_indices = @transform_2, window_bounds = array<i64: 5, 128>}, {pipeline_mode = #tpu.pipeline_mode<synchronous>, transform_indices = @transform_3, window_bounds = array<i64: 4, 1>}, {transform_indices = @transform_4, window_bounds = array<i64: 1, 1>}]} {
    %c0_i32 = arith.constant 0 : i32
    %0 = arith.cmpi eq, %arg1, %c0_i32 : i32
    %1 = arith.extui %0 : i1 to i32
    %c0_i32_0 = arith.constant 0 : i32
    %2 = arith.cmpi ne, %1, %c0_i32_0 : i32
    scf.if %2 {
      %cst_19 = arith.constant 0.000000e+00 : f32
      %60 = vector.broadcast %cst_19 : f32 to vector<1x128xf32>
      %c0_20 = arith.constant 0 : index
      %c0_21 = arith.constant 0 : index
      %61 = vector.load %arg7[%c0_20, %c0_21] : memref<1x128xf32, #tpu.memory_space<vmem>>, vector<1x128xf32>
      tpu.vector_store %arg7[%c0_20, %c0_21], %60 {strides = array<i32>} : memref<1x128xf32, #tpu.memory_space<vmem>>, vector<1x128xf32>,
    } else {
    }
    %c0 = arith.constant 0 : index
    %c0_1 = arith.constant 0 : index
    %3 = vector.load %arg4[%c0, %c0_1] : memref<5x128xf32, #tpu.memory_space<vmem>>, vector<5x128xf32>
    %4 = vector.extract_strided_slice %3 {offsets = [0, 0], sizes = [4, 128], strides = [1, 1]} : vector<5x128xf32> to vector<4x128xf32>
    %5 = vector.extract_strided_slice %3 {offsets = [4, 0], sizes = [1, 128], strides = [1, 1]} : vector<5x128xf32> to vector<1x128xf32>
    %6 = arith.fptosi %5 : vector<1x128xf32> to vector<1x128xi32>
    %c0_2 = arith.constant 0 : index
    %c0_3 = arith.constant 0 : index
    %7 = vector.load %arg5[%c0_2, %c0_3] : memref<4x1xf32, #tpu.memory_space<vmem>>, vector<4x1xf32>
    %8 = tpu.iota {dimensions = array<i32: 0>} : vector<4x128xi32>
    %9 = vector.broadcast %6 : vector<1x128xi32> to vector<4x128xi32>
    %10 = arith.cmpi eq, %8, %9 : vector<4x128xi32>
    %11 = arith.extui %10 : vector<4x128xi1> to vector<4x128xi32>
    %12 = arith.sitofp %11 : vector<4x128xi32> to vector<4x128xf32>
    %cst = arith.constant dense<0xFF800000> : vector<128xf32>
    %13 = vector.multi_reduction <maximumf>, %4, %cst [0] : vector<4x128xf32> to vector<128xf32>
    %14 = vector.shape_cast %13 : vector<128xf32> to vector<1x128xf32>
    %15 = vector.broadcast %14 : vector<1x128xf32> to vector<4x128xf32>
    %16 = arith.subf %4, %15 : vector<4x128xf32>
    %17 = math.exp %16 : vector<4x128xf32>
    %cst_4 = arith.constant dense<0.000000e+00> : vector<128xf32>
    %18 = vector.multi_reduction <add>, %17, %cst_4 [0] : vector<4x128xf32> to vector<128xf32>
    %19 = vector.shape_cast %18 : vector<128xf32> to vector<1x128xf32>
    %20 = arith.mulf %4, %12 : vector<4x128xf32>
    %cst_5 = arith.constant dense<0.000000e+00> : vector<128xf32>
    %21 = vector.multi_reduction <add>, %20, %cst_5 [0] : vector<4x128xf32> to vector<128xf32>
    %22 = vector.shape_cast %21 : vector<128xf32> to vector<1x128xf32>
    %23 = arith.mulf %17, %12 : vector<4x128xf32>
    %cst_6 = arith.constant dense<0.000000e+00> : vector<128xf32>
    %24 = vector.multi_reduction <add>, %23, %cst_6 [0] : vector<4x128xf32> to vector<128xf32>
    %25 = vector.shape_cast %24 : vector<128xf32> to vector<1x128xf32>
    %26 = arith.subf %22, %14 : vector<1x128xf32>
    %27 = math.log %19 : vector<1x128xf32>
    %28 = arith.subf %26, %27 : vector<1x128xf32>
    %29 = arith.divf %25, %19 : vector<1x128xf32>
    %cst_7 = arith.constant 1.000000e+00 : f32
    %30 = vector.broadcast %cst_7 : f32 to vector<1x128xf32>
    %31 = arith.subf %30, %29 : vector<1x128xf32>
    %cst_8 = arith.constant 1.000000e+00 : f32
    %32 = vector.broadcast %cst_8 : f32 to vector<1x128xf32>
    %33 = arith.mulf %32, %31 : vector<1x128xf32>
    %34 = arith.mulf %33, %31 : vector<1x128xf32>
    %35 = vector.broadcast %7 : vector<4x1xf32> to vector<4x128xf32>
    %36 = arith.mulf %35, %12 : vector<4x128xf32>
    %cst_9 = arith.constant dense<0.000000e+00> : vector<128xf32>
    %37 = vector.multi_reduction <add>, %36, %cst_9 [0] : vector<4x128xf32> to vector<128xf32>
    %38 = vector.shape_cast %37 : vector<128xf32> to vector<1x128xf32>
    %39 = arith.mulf %38, %34 : vector<1x128xf32>
    %cst_10 = arith.constant 0.000000e+00 : f32
    %40 = vector.broadcast %cst_10 : f32 to vector<1x128xf32>
    %41 = arith.subf %40, %39 : vector<1x128xf32>
    %42 = arith.mulf %41, %28 : vector<1x128xf32>
    %43 = tpu.iota {dimensions = array<i32: 1>} : vector<1x128xi32>
    %c1_i32 = arith.constant 1 : i32
    %44 = arith.muli %arg0, %c1_i32 : i32
    %45 = arith.addi %44, %arg1 : i32
    %c128_i32 = arith.constant 128 : i32
    %46 = arith.muli %45, %c128_i32 : i32
    %47 = vector.broadcast %46 : i32 to vector<1x128xi32>
    %48 = arith.addi %47, %43 : vector<1x128xi32>
    %c0_11 = arith.constant 0 : index
    %49 = memref.load %arg2[%c0_11] : memref<1xi32, #tpu.memory_space<smem>>
    %50 = vector.broadcast %49 : i32 to vector<1x128xi32>
    %51 = arith.cmpi slt, %48, %50 : vector<1x128xi32>
    %cst_12 = arith.constant 0.000000e+00 : f32
    %52 = vector.broadcast %cst_12 : f32 to vector<1x128xf32>
    %53 = arith.select %51, %42, %52 : vector<1x128xi1>, vector<1x128xf32>
    %c0_13 = arith.constant 0 : index
    %c0_14 = arith.constant 0 : index
    %54 = vector.load %arg7[%c0_13, %c0_14] : memref<1x128xf32, #tpu.memory_space<vmem>>, vector<1x128xf32>
    %55 = arith.addf %54, %53 : vector<1x128xf32>
    %c0_15 = arith.constant 0 : index
    %c0_16 = arith.constant 0 : index
    %56 = vector.load %arg7[%c0_15, %c0_16] : memref<1x128xf32, #tpu.memory_space<vmem>>, vector<1x128xf32>
    tpu.vector_store %arg7[%c0_15, %c0_16], %55 {strides = array<i32>} : memref<1x128xf32, #tpu.memory_space<vmem>>, vector<1x128xf32>,
    %c0_i32_17 = arith.constant 0 : i32
    %57 = arith.cmpi eq, %arg1, %c0_i32_17 : i32
    %58 = arith.extui %57 : i1 to i32
    %c0_i32_18 = arith.constant 0 : i32
    %59 = arith.cmpi ne, %58, %c0_i32_18 : i32
    scf.if %59 {
      %c0_19 = arith.constant 0 : index
      %c0_20 = arith.constant 0 : index
      %60 = vector.load %arg7[%c0_19, %c0_20] : memref<1x128xf32, #tpu.memory_space<vmem>>, vector<1x128xf32>
      %61 = vector.shape_cast %60 : vector<1x128xf32> to vector<1x1x128xf32>
      %cst_21 = arith.constant dense<0.000000e+00> : vector<1xf32>
      %62 = vector.multi_reduction <add>, %61, %cst_21 [1, 2] : vector<1x1x128xf32> to vector<1xf32>
      %63 = vector.shape_cast %62 : vector<1xf32> to vector<1x1x1xf32>
      %64 = vector.extract %63[0, 0, 0] : f32 from vector<1x1x1xf32>
      %c0_22 = arith.constant 0 : index
      %65 = memref.load %arg3[%c0_22] : memref<1xf32, #tpu.memory_space<smem>>
      %66 = arith.mulf %64, %65 : f32
      %c0_23 = arith.constant 0 : index
      %c0_24 = arith.constant 0 : index
      %67 = memref.load %arg6[%c0_23, %c0_24] : memref<1x1xf32, #tpu.memory_space<smem>>
      memref.store %66, %arg6[%c0_23, %c0_24] : memref<1x1xf32, #tpu.memory_space<smem>>
    } else {
    }
    return
  }
  func.func @transform_0(%arg0: i32, %arg1: i32) -> i32 {
    %c0_i32 = arith.constant 0 : i32
    %c0_i32_0 = arith.constant 0 : i32
    return %c0_i32 : i32
  }
  func.func @transform_1(%arg0: i32, %arg1: i32) -> i32 {
    %c0_i32 = arith.constant 0 : i32
    %c0_i32_0 = arith.constant 0 : i32
    return %c0_i32 : i32
  }
  func.func @transform_2(%arg0: i32, %arg1: i32) -> (i32, i32) {
    %c1_i32 = arith.constant 1 : i32
    %0 = arith.muli %arg0, %c1_i32 : i32
    %1 = arith.addi %0, %arg1 : i32
    %c0_i32 = arith.constant 0 : i32
    %2 = arith.minsi %1, %c0_i32 : i32
    %c0_i32_0 = arith.constant 0 : i32
    %c0_i32_1 = arith.constant 0 : i32
    return %c0_i32_0, %2 : i32, i32
  }
  func.func @transform_3(%arg0: i32, %arg1: i32) -> (i32, i32) {
    %c0_i32 = arith.constant 0 : i32
    %c0_i32_0 = arith.constant 0 : i32
    %c0_i32_1 = arith.constant 0 : i32
    return %c0_i32, %c0_i32_0 : i32, i32
  }
  func.func @transform_4(%arg0: i32, %arg1: i32) -> (i32, i32) {
    %c0_i32 = arith.constant 0 : i32
    %c0_i32_0 = arith.constant 0 : i32
    return %arg0, %c0_i32 : i32, i32
  }
}

</mosaic_0001>

<llo_original>
// kernel: tpu_custom_call.1
$region0: #{tpu_custom_call.1}
  #allocation0 [shape = 'u32[]', space=smem, size = 0x4, offset = 0x4, fixed_abs, tag = 'smem constant byte address 0x4 - core index']
  #allocation1 [shape = 'u32[72,128]{1,0:T(1,128)}', space=vmem, size = 0x9000, scoped, tag = 'internal scratch']
  #allocation2 [shape = 'f32[1,128]{1,0:T(1,128)}', space=vmem, size = 0x200, scoped, tag = 'scratch operand']
  #allocation3 [shape = 's32[1]{0:T(128)S(6)}', space=smem, size = 0x200, scoped, tag = 'scoped memory for tpu_custom_call.1']
  #allocation4 [shape = 'f32[1]{0:T(128)S(6)}', space=smem, size = 0x200, scoped, tag = 'scoped memory for tpu_custom_call.1']
  %s0 = inlined_call_operand.<no memory space> [shape: s32[1], index: 0, kind: input, shape index: {}]
  %s1 = inlined_call_operand.<no memory space> [shape: f32[1], index: 1, kind: input, shape index: {}]
  %s2 = inlined_call_operand.hbm [shape: f32[5,8], index: 2, kind: input, shape index: {}]
  %s3 = inlined_call_operand.vmem [shape: f32[4,1], index: 3, kind: input, shape index: {}]
  %s4 = inlined_call_operand.hbm [shape: f32[1,1], index: 4, kind: output, shape index: {}]
  %s5 = sld [smem:[#allocation0]]
  $region38: #{tpu_custom_call.1} parent=0
    _
  %s7 = ssub.s32 1, %s5
  %s8 = scalar_select 0, %s7, %s5
  %9 = sst [smem:[#allocation3]] %s0
  %10 = sst [smem:[#allocation4]] %s1
  $region1: #{tpu_custom_call.1} parent=0
    #allocation5 [shape = 'u8[4096]{0}', space=vmem, size = 0x1000, scoped, tag = 'input window, operand 2, single buffered']
    #allocation6 [shape = 's32[1]{0}', space=sflag, size = 0x4, scoped, tag = 'scoped memory for tpu_custom_call.1']
    #allocation7 [shape = 's32[1]{0}', space=sflag, size = 0x4, scoped, tag = 'scoped memory for tpu_custom_call.1']
    #allocation8 [shape = 'u8[512]{0}', space=smem, size = 0x200, scoped, tag = 'output window, operand 0, single buffered']
    %11 = vsyncpa [#allocation6], 0
    %12 = vsyncpa [#allocation7], 0
    // Predicated region
    $region2: #{tpu_custom_call.1} parent=1 // pred_check
      _
    $region3: #{tpu_custom_call.1} parent=1 // pred_check_branch
      %14 = sbr.rel (0) target = $region5
    $region4: #{tpu_custom_call.1} parent=1 // pred_region
      _
    $region5: #{tpu_custom_call.1} parent=1 // pred_fallthru
      _
    // Predicated region
    $region6: #{tpu_custom_call.1} parent=1 // pred_check
      _
    $region7: #{tpu_custom_call.1} parent=1 // pred_check_branch
      %16 = sbr.rel (0) target = $region9
    $region8: #{tpu_custom_call.1} parent=1 // pred_region
      _
    $region9: #{tpu_custom_call.1} parent=1 // pred_fallthru
      _
    // Predicated region
    $region10: #{tpu_custom_call.1} parent=1 // pred_check
      _
    $region11: #{tpu_custom_call.1} parent=1 // pred_check_branch
      %18 = sbr.rel (0) target = $region13
    $region12: #{tpu_custom_call.1} parent=1 // pred_region
      %s19 = sadd.s32 0, 0
      %p20 = scmp.lt.s32.totalorder %s19, 0
      %s21 = scalar_select %p20, %s19, 0
      %23 = vsyncadd [#allocation6], 0
      %s24 = smul.addr %s21, 8
      %s25 = scalar_lea.hbm %s2, %s24
      %s27 = sshll.u32 %s25, 4
      %s28 = int_to_ptr.hbm [resolvable:$true] %s27
      %s29 = sshll.u32 [#allocation5], 4
      %s30 = int_to_ptr.vmem [resolvable:$true] %s29
      %32 = dma.hbm_to_vmem [thread:$0]  %s28, 128, %s30, [#allocation6]
    $region13: #{tpu_custom_call.1} parent=1 // pred_fallthru
      _
    // Predicated region
    $region14: #{tpu_custom_call.1} parent=1 // pred_check
      _
    $region15: #{tpu_custom_call.1} parent=1 // pred_check_branch
      %34 = sbr.rel (0) target = $region17
    $region16: #{tpu_custom_call.1} parent=1 // pred_region
      _
    $region17: #{tpu_custom_call.1} parent=1 // pred_fallthru
      _
    // Predicated region
    $region18: #{tpu_custom_call.1} parent=1 // pred_check
      _
    $region19: #{tpu_custom_call.1} parent=1 // pred_check_branch
      %36 = sbr.rel (0) target = $region21
    $region20: #{tpu_custom_call.1} parent=1 // pred_region
      %38 = dma.done [#allocation6], 128
    $region21: #{tpu_custom_call.1} parent=1 // pred_fallthru
      _
    %s39 = sadd.s32 0, 0
    %p40 = scmp.lt.s32.totalorder %s39, 0
    %s41 = scalar_select %p40, %s39, 0
    %p42 = scmp.eq.s32.totalorder 0, 0
    // Predicated region
    $region22: #{tpu_custom_call.1} parent=1 // pred_check
      %p43 = pneg %p42
    $region23: #{tpu_custom_call.1} parent=1 // pred_check_branch
      %45 = sbr.rel (%p43) target = $region25
    $region24: #{tpu_custom_call.1} parent=1 // pred_region
      %46 = vst [vmem:[#allocation2] sm:$0x1] 0.0
    $region25: #{tpu_custom_call.1} parent=1 // pred_fallthru
      _
    %v47 = vld [vmem:[#allocation5] sm:$0x1f]
    %v48 = vcvt.f32.s32.to.zero.pseudo %v47
    %v49 = vld [vmem:[%s3] sm:$0xf]
    %v50 = vlaneseq
    %v51 = vshrl.u32 %v50, 7
    %v52 = vperm.slane %v48, 4
    %vm53 = vcmp.eq.s32.totalorder %v51, %v52
    %v54 = vsel %vm53, 1, 0
    %v55 = vcvt.s32.f32 %v54
    %vm56 = vcmask 1043456
    %v57 = vsel %vm56, %v47, -inf
    %v58 = vrot.slane %v57, 4
    %v59 = vmax.f32 %v57, %v58
    %v60 = vrot.slane %v59, 2
    %v61 = vmax.f32 %v59, %v60
    %v62 = vrot.slane %v61, 1
    %v63 = vmax.f32 %v61, %v62
    %v64 = vsub.f32 %v47, %v63
    %v65 = vmul.f32 %v64, 1.442695
    %v66 = vpow.pop %v65
    %v67 = vsel %vm56, %v66, 0.0
    %v68 = vrot.slane %v67, 4
    %v69 = vadd.f32 %v67, %v68
    %v70 = vrot.slane %v69, 2
    %v71 = vadd.f32 %v69, %v70
    %v72 = vrot.slane %v71, 1
    %v73 = vadd.f32 %v71, %v72
    %v74 = vmul.f32 %v47, %v55
    %v75 = vsel %vm56, %v74, 0.0
    %v76 = vrot.slane %v75, 4
    %v77 = vadd.f32 %v75, %v76
    %v78 = vrot.slane %v77, 2
    %v79 = vadd.f32 %v77, %v78
    %v80 = vrot.slane %v79, 1
    %v81 = vadd.f32 %v79, %v80
    %v82 = vmul.f32 %v66, %v55
    %v83 = vsel %vm56, %v82, 0.0
    %v84 = vrot.slane %v83, 4
    %v85 = vadd.f32 %v83, %v84
    %v86 = vrot.slane %v85, 2
    %v87 = vadd.f32 %v85, %v86
    %v88 = vrot.slane %v87, 1
    %v89 = vadd.f32 %v87, %v88
    %v90 = vsub.f32 %v81, %v63
    %v91 = vlog2.pop %v73
    %v92 = vmul.f32 %v91, 0.6931472
    %v93 = vsub.f32 %v90, %v92
    %v94 = vrcp.pop %v73
    %v95 = vmul.f32 %v73, %v94
    %v96 = vsub.f32 1.0, %v95
    %v97 = vmul.f32 %v94, %v96
    %v98 = vadd.f32 %v94, %v97
    %vm99 = vweird.f32 %v73
    %vm100 = vweird.f32 %v94
    %vm101 = vmor %vm99, %vm100
    %v102 = vsel %vm101, %v94, %v98
    %v103 = vand.u32 2147483647, %v73
    %vm104 = vcmp.eq.f32.partialorder %v103, 8.507059e+37
    %v105 = vand.u32 %v73, 2147483648
    %v106 = vor.u32 1.1754944e-38, %v105
    %v107 = vsel %vm104, %v106, %v102
    %v108 = vmul.f32 %v89, %v107
    %v109 = vsub.f32 1.0, %v108
    %v110 = vmul.f32 %v109, %v109
    %112 = vset.pattern.permute.xlu0 0
    %113 = vperm.xlu0 %112, %v49
    %v114 = vpop.permute.xlu0 %113
    %v116 = vmul.f32 %v114, %v55
    %v117 = vsel %vm56, %v116, 0.0
    %v118 = vrot.slane %v117, 4
    %v119 = vadd.f32 %v117, %v118
    %v120 = vrot.slane %v119, 2
    %v121 = vadd.f32 %v119, %v120
    %v122 = vrot.slane %v121, 1
    %v123 = vadd.f32 %v121, %v122
    %v124 = vmul.f32 %v123, %v110
    %v125 = vsub.f32 0.0, %v124
    %v126 = vmul.f32 %v125, %v93
    %v127 = vlaneseq
    %v128 = vand.u32 %v127, 127
    %s129 = sadd.s32 0, 0
    %s130 = smul.u32 %s129, 128
    %v131 = vstv %s130
    %v132 = vadd.s32 %v131, %v128
    %s133 = sld [smem:[#allocation3]]
    %v134 = vstv %s133
    %vm135 = vcmp.lt.s32.totalorder %v132, %v134
    %v136 = vsel %vm135, %v126, 0.0
    %v137 = vld [vmem:[#allocation2] sm:$0x1]
    %v138 = vadd.f32 %v137, %v136
    %139 = vst [vmem:[#allocation2] sm:$0x1] %v138
    // Predicated region
    $region26: #{tpu_custom_call.1} parent=1 // pred_check
      %p140 = pneg %p42
    $region27: #{tpu_custom_call.1} parent=1 // pred_check_branch
      %142 = sbr.rel (%p140) target = $region29
    $region28: #{tpu_custom_call.1} parent=1 // pred_region
      %v143 = vld [vmem:[#allocation2] sm:$0x1]
      %vm144 = vcmask 1040384
      %v145 = vsel %vm144, %v143, 0.0
      %146 = vadd.xlane.f32.xlu0 %v145
      %v147 = vpop.xlane.xlu0 %146
      %v148 = vrot.slane %v147, 4
      %v149 = vadd.f32 %v147, %v148
      %v150 = vrot.slane %v149, 2
      %v151 = vadd.f32 %v149, %v150
      %v152 = vrot.slane %v151, 1
      %v153 = vadd.f32 %v151, %v152
      %s154 = vtos %v153
      %s155 = sld [smem:[#allocation4]]
      %s156 = smul.f32 %s154, %s155
      %s157 = scalar_lea.smem [#allocation8], 0
      %158 = sst [smem:[%s157]] %s156
    $region29: #{tpu_custom_call.1} parent=1 // pred_fallthru
      _
    // Predicated region
    $region30: #{tpu_custom_call.1} parent=1 // pred_check
      _
    $region31: #{tpu_custom_call.1} parent=1 // pred_check_branch
      %160 = sbr.rel (0) target = $region33
    $region32: #{tpu_custom_call.1} parent=1 // pred_region
      %162 = vsyncadd [#allocation7], 0
      %s164 = sshll.u32 %s4, 4
      %s165 = int_to_ptr.hbm [resolvable:$true] %s164
      %167 = dma.smem_to_hbm [#allocation8], 16, %s165, [#allocation7]
    $region33: #{tpu_custom_call.1} parent=1 // pred_fallthru
      _
    // Predicated region
    $region34: #{tpu_custom_call.1} parent=1 // pred_check
      _
    $region35: #{tpu_custom_call.1} parent=1 // pred_check_branch
      %169 = sbr.rel (0) target = $region37
    $region36: #{tpu_custom_call.1} parent=1 // pred_region
      %171 = dma.done [#allocation7], 16
    $region37: #{tpu_custom_call.1} parent=1 // pred_fallthru
      _
    %172 = sfence
    %173 = vsyncpa [#allocation6], 1
    %174 = vsyncpa [#allocation7], 1

</llo_original>
